<compile_context>
chip_gen: v7x
topology: tpu7x:2x2x1
jax: 0.10.0
libtpu: 0.0.40
codegen_flags: <defaults>
</compile_context>

<pallas_src>
import functools

import jax
import jax.numpy as jnp
from jax.experimental import pallas as pl
from jax.experimental.pallas import tpu as pltpu


def _round_up(x, m):
    return ((x + m - 1) // m) * m


def _cdiv(a, b):
    return -(-a // b)


def _vmem_cap_bytes():
    """Chip-aware VMEM budget: ~96 MiB on 128-MiB parts (v5e/v6e), ~40 MiB on v7x."""
    phys = 64 << 20
    try:
        phys = int(getattr(pltpu.get_tpu_info(), "vmem_capacity_bytes", phys))
    except Exception:
        pass
    return (96 << 20) if phys >= (100 << 20) else (40 << 20)


def _block_spec(shape, index_map, single_buffer=False):
    """BlockSpec, optionally single-buffered for grid-invariant blocks (saves VMEM)."""
    if single_buffer and hasattr(pl, "Buffered"):
        try:
            return pl.BlockSpec(shape, index_map, pipeline_mode=pl.Buffered(1))
        except TypeError:
            pass
    return pl.BlockSpec(shape, index_map)


def _conv1x1_bn_kernel(x_ref, w_ref, scale_ref, shift_ref, o_ref, *, compute_dtype):
    # x_ref:     (Bt, Cin, t_hw)   activations in native dtype; cast in-kernel (VPU)
    # w_ref:     (t_cout, Cin)     conv weights in compute dtype (resident across hw tiles)
    # scale_ref: (t_cout, 1)       f32 BN scale = gamma / sqrt(var + eps)
    # shift_ref: (t_cout, 1)       f32 BN shift = beta - mean * scale
    # o_ref:     (Bt, t_cout, t_hw)
    w = w_ref[...]
    scale = scale_ref[...]
    shift = shift_ref[...]
    for b in range(x_ref.shape[0]):           # static unroll over the small batch block
        x = x_ref[b].astype(compute_dtype)    # HBM read stays native-width; cast hides under DMA/MXU
        acc = jnp.dot(w, x, preferred_element_type=jnp.float32)   # MXU, f32 accumulation
        o_ref[b] = (acc * scale + shift).astype(o_ref.dtype)      # BN applied in f32


def _pick_batch_block(n, t_hw, n_hw_tiles, n_cout_tiles):
    """Pack several small images per grid step, but keep >= 2 grid steps (v7x megacore)."""
    if n <= 1 or t_hw >= 512:
        return 1
    best = 1
    target = max(1, 512 // t_hw)
    for bt in range(2, min(n, target) + 1):
        if n % bt == 0 and (n // bt) * n_hw_tiles * n_cout_tiles >= 2:
            best = bt
    return best


def conv2d_bn_1x1(x_nchw, w_conv, gamma, beta, running_mean, running_var,
                  eps=1e-5, tile_hw=2048, compute_dtype=jnp.bfloat16,
                  out_dtype=jnp.bfloat16):
    """Conv2d(in, out, k=1, s=1, p=0, groups=1, bias=False) -> BatchNorm2d -> Identity."""
    N, Cin, H, W = x_nchw.shape
    Cout = w_conv.shape[0]
    HW = H * W

    # ---- BN parameters in f32; applied to the f32 accumulator inside the kernel ----
    scale = (gamma.astype(jnp.float32) /
             jnp.sqrt(running_var.astype(jnp.float32) + eps)).reshape(Cout, 1)
    shift = (beta.astype(jnp.float32).reshape(Cout, 1)
             - running_mean.astype(jnp.float32).reshape(Cout, 1) * scale)
    w2d = w_conv.reshape(Cout, Cin).astype(compute_dtype)        # tiny, grid-invariant

    # ---- free NCHW view as (N, Cin, HW); NO pad, NO activation cast in the wrapper ----
    x_mat = x_nchw.reshape(N, Cin, HW)

    # ---- Cout tiling (caps weight + output tile footprint for large-channel layers) ----
    t_cout = Cout if Cout <= 512 else 512
    n_cout_tiles = _cdiv(Cout, t_cout)

    # ---- spatial tile: 128-aligned, roughly even split of HW, clamped by VMEM budget ----
    x_isz = jnp.dtype(x_nchw.dtype).itemsize
    cd_isz = jnp.dtype(compute_dtype).itemsize
    out_isz = jnp.dtype(out_dtype).itemsize
    cin_sub = _round_up(Cin, max(8, 32 // x_isz))
    cin_lane = _round_up(Cin, 128)
    tco_sub = _round_up(t_cout, max(8, 32 // out_isz))

    cap = _vmem_cap_bytes()
    fixed = 2 * tco_sub * cin_lane * cd_isz + 12 * tco_sub * 128 * 4
    per_lane = 2 * cin_sub * x_isz + 2 * tco_sub * out_isz       # double-buffered x + out tiles
    t_hw_fit = max(128, ((cap // 2 - fixed) // max(per_lane, 1)) // 128 * 128)
    tile_hw_eff = max(128, min(tile_hw, t_hw_fit))

    n_hw_tiles = _cdiv(_round_up(HW, 128), tile_hw_eff)
    t_hw = _round_up(_cdiv(HW, n_hw_tiles), 128)
    n_hw_tiles = _cdiv(HW, t_hw)             # ragged last tile handled (masked) by Pallas

    # ---- small-image batch blocking ----
    bt = _pick_batch_block(N, t_hw, n_hw_tiles, n_cout_tiles)
    grid = (N // bt, n_cout_tiles, n_hw_tiles)   # hw innermost: weight block stays resident

    single_buf = n_cout_tiles == 1               # truly grid-invariant weight/scale/shift
    w_bufs = 1 if single_buf else 2
    est = (2 * bt * cin_sub * t_hw * x_isz
           + 2 * bt * tco_sub * t_hw * out_isz
           + w_bufs * tco_sub * cin_lane * cd_isz
           + 6 * tco_sub * 128 * 4)
    vmem_limit = int(min(cap, max(2 * est, 16 << 20)))

    kernel = functools.partial(_conv1x1_bn_kernel, compute_dtype=compute_dtype)

    out_mat = pl.pallas_call(
        kernel,
        out_shape=jax.ShapeDtypeStruct((N, Cout, HW), out_dtype),
        grid_spec=pltpu.PrefetchScalarGridSpec(
            num_scalar_prefetch=0,
            grid=grid,
            in_specs=[
                pl.BlockSpec((bt, Cin, t_hw), lambda n, co, j: (n, 0, j)),
                _block_spec((t_cout, Cin), lambda n, co, j: (co, 0), single_buf),
                _block_spec((t_cout, 1), lambda n, co, j: (co, 0), single_buf),
                _block_spec((t_cout, 1), lambda n, co, j: (co, 0), single_buf),
            ],
            out_specs=pl.BlockSpec((bt, t_cout, t_hw), lambda n, co, j: (n, co, j)),
        ),
        compiler_params=pltpu.CompilerParams(
            dimension_semantics=("parallel", "parallel", "arbitrary"),
            vmem_limit_bytes=vmem_limit),
    )(x_mat, w2d, scale, shift)

    return out_mat.reshape(N, Cout, H, W)


def _reference(x_nchw, w_conv, gamma, beta, running_mean, running_var, eps=1e-5):
    # pure-JAX f32 reference: 1x1 conv as einsum + inference-mode BN
    y = jnp.einsum('nchw,oc->nohw', x_nchw, w_conv.reshape(w_conv.shape[0], -1))
    scale = gamma / jnp.sqrt(running_var + eps)
    shift = beta - running_mean * scale
    return y * scale[None, :, None, None] + shift[None, :, None, None]


if __name__ == "__main__":
    key = jax.random.PRNGKey(0)
    k1, k2, k3, k4, k5, k6 = jax.random.split(key, 6)

    # small shapes consistent with the module: batch=2, in_ch=4, out_ch=8, spatial=16
    N, Cin, Cout, H, W = 2, 4, 8, 16, 16

    x = jax.random.normal(k1, (N, Cin, H, W), dtype=jnp.float32)
    w_conv = jax.random.normal(k2, (Cout, Cin, 1, 1), dtype=jnp.float32) * 0.1
    gamma = jax.random.normal(k3, (Cout,), dtype=jnp.float32) * 0.1 + 1.0
    beta = jax.random.normal(k4, (Cout,), dtype=jnp.float32) * 0.1
    running_mean = jax.random.normal(k5, (Cout,), dtype=jnp.float32) * 0.05
    running_var = jnp.abs(jax.random.normal(k6, (Cout,), dtype=jnp.float32)) * 0.1 + 1.0

    out = conv2d_bn_1x1(x, w_conv, gamma, beta, running_mean, running_var)
    out = jax.block_until_ready(out)

    ref = _reference(x, w_conv, gamma, beta, running_mean, running_var)
    assert out.shape == (N, Cout, H, W)
    # bf16 activations/weights/output with f32 accumulation -> loose tolerance vs f32 ref
    assert jnp.allclose(out.astype(jnp.float32), ref, atol=3e-2, rtol=3e-2), \
        "mismatch vs reference"

    print("KERNEL_OK")
</pallas_src>

<mosaic_0001>
module attributes {stable_mosaic.version = 11 : i64} {
  func.func @_conv1x1_bn_kernel(%arg0: i32, %arg1: i32, %arg2: i32, %arg3: memref<1x4x256xf32, #tpu.memory_space<vmem>>, %arg4: memref<8x4xbf16, #tpu.memory_space<vmem>>, %arg5: memref<8x1xf32, #tpu.memory_space<vmem>>, %arg6: memref<8x1xf32, #tpu.memory_space<vmem>>, %arg7: memref<1x8x256xbf16, #tpu.memory_space<vmem>>) attributes {dimension_semantics = [#tpu.dimension_semantics<parallel>, #tpu.dimension_semantics<parallel>, #tpu.dimension_semantics<arbitrary>], iteration_bounds = array<i64: 2, 1, 1>, scalar_prefetch = 0 : i64, scratch_operands = 0 : i64, tpu.core_type = #tpu.core_type<tc>, window_params = [{transform_indices = @transform_0, window_bounds = array<i64: 1, 4, 256>}, {pipeline_mode = #tpu.pipeline_mode<synchronous>, transform_indices = @transform_1, window_bounds = array<i64: 8, 4>}, {pipeline_mode = #tpu.pipeline_mode<synchronous>, transform_indices = @transform_2, window_bounds = array<i64: 8, 1>}, {pipeline_mode = #tpu.pipeline_mode<synchronous>, transform_indices = @transform_3, window_bounds = array<i64: 8, 1>}, {transform_indices = @transform_4, window_bounds = array<i64: 1, 8, 256>}]} {
    %c0 = arith.constant 0 : index
    %c0_0 = arith.constant 0 : index
    %0 = vector.load %arg4[%c0, %c0_0] : memref<8x4xbf16, #tpu.memory_space<vmem>>, vector<8x4xbf16>
    %c0_1 = arith.constant 0 : index
    %c0_2 = arith.constant 0 : index
    %1 = vector.load %arg5[%c0_1, %c0_2] : memref<8x1xf32, #tpu.memory_space<vmem>>, vector<8x1xf32>
    %c0_3 = arith.constant 0 : index
    %c0_4 = arith.constant 0 : index
    %2 = vector.load %arg6[%c0_3, %c0_4] : memref<8x1xf32, #tpu.memory_space<vmem>>, vector<8x1xf32>
    %c0_5 = arith.constant 0 : index
    %c0_6 = arith.constant 0 : index
    %c0_7 = arith.constant 0 : index
    %3 = vector.load %arg3[%c0_5, %c0_6, %c0_7] : memref<1x4x256xf32, #tpu.memory_space<vmem>>, vector<1x4x256xf32>
    %4 = vector.shape_cast %3 : vector<1x4x256xf32> to vector<4x256xf32>
    %5 = arith.truncf %4 : vector<4x256xf32> to vector<4x256xbf16>
    %cst = arith.constant dense<0.000000e+00> : vector<8x256xf32>
    %6 = tpu.matmul %0, %5, %cst {dimension_numbers = #tpu.dot_dimension_numbers<[1], [0], [0], [1], [0, 0, 1, 1], [], []>} : vector<8x4xbf16>, vector<4x256xbf16>, vector<8x256xf32> -> vector<8x256xf32>
    %7 = vector.broadcast %1 : vector<8x1xf32> to vector<8x256xf32>
    %8 = arith.mulf %6, %7 : vector<8x256xf32>
    %9 = vector.broadcast %2 : vector<8x1xf32> to vector<8x256xf32>
    %10 = arith.addf %8, %9 : vector<8x256xf32>
    %11 = arith.truncf %10 : vector<8x256xf32> to vector<8x256xbf16>
    %c0_8 = arith.constant 0 : index
    %c0_9 = arith.constant 0 : index
    %c0_10 = arith.constant 0 : index
    %12 = vector.load %arg7[%c0_8, %c0_9, %c0_10] : memref<1x8x256xbf16, #tpu.memory_space<vmem>>, vector<1x8x256xbf16>
    %13 = vector.shape_cast %12 : vector<1x8x256xbf16> to vector<8x256xbf16>
    %14 = vector.shape_cast %11 : vector<8x256xbf16> to vector<1x8x256xbf16>
    tpu.vector_store %arg7[%c0_8, %c0_9, %c0_10], %14 {strides = array<i32>} : memref<1x8x256xbf16, #tpu.memory_space<vmem>>, vector<1x8x256xbf16>,
    return
  }
  func.func @transform_0(%arg0: i32, %arg1: i32, %arg2: i32) -> (i32, i32, i32) {
    %c0_i32 = arith.constant 0 : i32
    %c0_i32_0 = arith.constant 0 : i32
    return %arg0, %c0_i32, %arg2 : i32, i32, i32
  }
  func.func @transform_1(%arg0: i32, %arg1: i32, %arg2: i32) -> (i32, i32) {
    %c0_i32 = arith.constant 0 : i32
    %c0_i32_0 = arith.constant 0 : i32
    return %arg1, %c0_i32 : i32, i32
  }
  func.func @transform_2(%arg0: i32, %arg1: i32, %arg2: i32) -> (i32, i32) {
    %c0_i32 = arith.constant 0 : i32
    %c0_i32_0 = arith.constant 0 : i32
    return %arg1, %c0_i32 : i32, i32
  }
  func.func @transform_3(%arg0: i32, %arg1: i32, %arg2: i32) -> (i32, i32) {
    %c0_i32 = arith.constant 0 : i32
    %c0_i32_0 = arith.constant 0 : i32
    return %arg1, %c0_i32 : i32, i32
  }
  func.func @transform_4(%arg0: i32, %arg1: i32, %arg2: i32) -> (i32, i32, i32) {
    %c0_i32 = arith.constant 0 : i32
    return %arg0, %arg1, %arg2 : i32, i32, i32
  }
}

</mosaic_0001>

<llo_original>
// kernel: tpu_custom_call.1
$region0: #{tpu_custom_call.1}
  #allocation0 [shape = 'u32[]', space=smem, size = 0x4, offset = 0x4, fixed_abs, tag = 'smem constant byte address 0x4 - core index']
  #allocation1 [shape = 'u32[144,128]{1,0:T(1,128)}', space=vmem, size = 0x12000, scoped, tag = 'internal scratch']
  %s0 = inlined_call_operand.vmem [shape: f32[2,4,256], index: 0, kind: input, shape index: {}]
  %s1 = inlined_call_operand.vmem [shape: bf16[8,4], index: 1, kind: input, shape index: {}]
  %s2 = inlined_call_operand.vmem [shape: f32[8,1], index: 2, kind: input, shape index: {}]
  %s3 = inlined_call_operand.vmem [shape: f32[8,1], index: 3, kind: input, shape index: {}]
  %s4 = inlined_call_operand.hbm [shape: bf16[2,8,256], index: 4, kind: output, shape index: {}]
  %s5 = sld [smem:[#allocation0]]
  $region49: #{tpu_custom_call.1} parent=0
    _
  %s7 = ssub.s32 1, %s5
  %s8 = scalar_select 0, %s7, %s5
  $region1: #{tpu_custom_call.1} parent=0
    #allocation2 [shape = 'u8[8192]{0}', space=vmem, size = 0x2000, scoped, tag = 'output window, operand 0']
    #allocation3 [shape = 's32[2]{0}', space=sflag, size = 0x8, scoped, tag = 'scoped memory for tpu_custom_call.1']
    %9 = vsyncpa [#allocation3], 0
    %s10 = scalar_lea.sflag [#allocation3], 1
    %11 = vsyncpa %s10, 0
    loop: start=0, step=1, limit=4
    $region2: #{tpu_custom_call.1} parent=1 // loop_pre_header
      _
    $region3: #{tpu_custom_call.1} parent=1 // loop_header
      %s13 = sphi 0, %s17
      %p14 = scmp.ge.s32.totalorder %s13, 4
      %s20 = sphi 0, %s39
      %s21 = sphi 0, %s35
      %s22 = sphi 0, %s31
      %s23 = sphi 0, %s20
      %s24 = sphi 0, %s21
      %s25 = sphi 0, %s22
      %s26 = sphi 0, %s23
      %s27 = sphi 0, %s24
      %s28 = sphi 0, %s25
      %s44 = sphi 0, %s46
      %s47 = sphi 0, %s44
      %s48 = sphi 0, %s47
      %s64 = sphi 0, %s48
      %s70 = sphi 0, %s72
      %s73 = sphi 0, %s70
      %s74 = sphi 0, %s73
      %s90 = sphi 0, %s74
      %s96 = sphi 0, %s98
      %s99 = sphi 0, %s96
      %s100 = sphi 0, %s99
      %s116 = sphi 0, %s100
      %s122 = sphi 0, %s124
      %s125 = sphi 0, %s122
      %s126 = sphi 0, %s125
      %s142 = sphi 0, %s126
      %s152 = sphi 0, %s154
      %s155 = sphi 0, %s152
      %s156 = sphi 0, %s155
      %s172 = sphi 0, %s156
    $region4: #{tpu_custom_call.1} parent=1 // loop_header_branch
      %16 = sbr.rel (%p14) target = $region8
    $region5: #{tpu_custom_call.1} parent=1 // loop_body
      %s18 = ssub.s32 %s13, 1
      %s19 = ssub.s32 %s13, 2
      %s29 = sadd.s32 1, %s22
      %p30 = scmp.ge.s32.totalorder %s29, 1
      %s31 = scalar_select %p30, 0, %s29
      %s32 = sadd.s32 1, %s21
      %s33 = scalar_select %p30, %s32, %s21
      %p34 = scmp.ge.s32.totalorder %s33, 1
      %s35 = scalar_select %p34, 0, %s33
      %s36 = sadd.s32 1, %s20
      %s37 = scalar_select %p34, %s36, %s20
      %p38 = scmp.ge.s32.totalorder %s37, 2
      %s39 = scalar_select %p38, 0, %s37
      %s40 = ssub.s32 %s20, %s39
      %s41 = ssub.s32 %s22, %s31
      %s42 = sor.u32 %s40, %s41
      %p43 = scmp.eq.s32.totalorder %s42, 0
      %s45 = sadd.s32 %s44, 1
      %s46 = scalar_select %p43, %s44, %s45
      %p49 = pneg %p43
      %p50 = scmp.eq.s32.totalorder %s13, 1
      %p51 = por %p49, %p50
      %p52 = scmp.ne.s32.totalorder %s44, %s47
      %p53 = scmp.eq.s32.totalorder %s13, 0
      %p54 = por %p52, %p53
      %p55 = scmp.ne.s32.totalorder %s44, %s47
      %p56 = scmp.eq.s32.totalorder %s18, 1
      %p57 = por %p55, %p56
      %p58 = scmp.ne.s32.totalorder %s47, %s48
      %p59 = scmp.eq.s32.totalorder %s18, 0
      %p60 = por %p58, %p59
      %p61 = scmp.ne.s32.totalorder %s47, %s48
      %p62 = scmp.eq.s32.totalorder %s19, 1
      %p63 = por %p61, %p62
      %p65 = scmp.ne.s32.totalorder %s48, %s64
      %p66 = scmp.eq.s32.totalorder %s19, 0
      %p67 = por %p65, %p66
      %s68 = ssub.s32 %s21, %s35
      %p69 = scmp.eq.s32.totalorder %s68, 0
      %s71 = sadd.s32 %s70, 1
      %s72 = scalar_select %p69, %s70, %s71
      %p75 = pneg %p69
      %p76 = scmp.eq.s32.totalorder %s13, 1
      %p77 = por %p75, %p76
      %p78 = scmp.ne.s32.totalorder %s70, %s73
      %p79 = scmp.eq.s32.totalorder %s13, 0
      %p80 = por %p78, %p79
      %p81 = scmp.ne.s32.totalorder %s70, %s73
      %p82 = scmp.eq.s32.totalorder %s18, 1
      %p83 = por %p81, %p82
      %p84 = scmp.ne.s32.totalorder %s73, %s74
      %p85 = scmp.eq.s32.totalorder %s18, 0
      %p86 = por %p84, %p85
      %p87 = scmp.ne.s32.totalorder %s73, %s74
      %p88 = scmp.eq.s32.totalorder %s19, 1
      %p89 = por %p87, %p88
      %p91 = scmp.ne.s32.totalorder %s74, %s90
      %p92 = scmp.eq.s32.totalorder %s19, 0
      %p93 = por %p91, %p92
      %s94 = ssub.s32 %s21, %s35
      %p95 = scmp.eq.s32.totalorder %s94, 0
      %s97 = sadd.s32 %s96, 1
      %s98 = scalar_select %p95, %s96, %s97
      %p101 = pneg %p95
      %p102 = scmp.eq.s32.totalorder %s13, 1
      %p103 = por %p101, %p102
      %p104 = scmp.ne.s32.totalorder %s96, %s99
      %p105 = scmp.eq.s32.totalorder %s13, 0
      %p106 = por %p104, %p105
      %p107 = scmp.ne.s32.totalorder %s96, %s99
      %p108 = scmp.eq.s32.totalorder %s18, 1
      %p109 = por %p107, %p108
      %p110 = scmp.ne.s32.totalorder %s99, %s100
      %p111 = scmp.eq.s32.totalorder %s18, 0
      %p112 = por %p110, %p111
      %p113 = scmp.ne.s32.totalorder %s99, %s100
      %p114 = scmp.eq.s32.totalorder %s19, 1
      %p115 = por %p113, %p114
      %p117 = scmp.ne.s32.totalorder %s100, %s116
      %p118 = scmp.eq.s32.totalorder %s19, 0
      %p119 = por %p117, %p118
      %s120 = ssub.s32 %s21, %s35
      %p121 = scmp.eq.s32.totalorder %s120, 0
      %s123 = sadd.s32 %s122, 1
      %s124 = scalar_select %p121, %s122, %s123
      %p127 = pneg %p121
      %p128 = scmp.eq.s32.totalorder %s13, 1
      %p129 = por %p127, %p128
      %p130 = scmp.ne.s32.totalorder %s122, %s125
      %p131 = scmp.eq.s32.totalorder %s13, 0
      %p132 = por %p130, %p131
      %p133 = scmp.ne.s32.totalorder %s122, %s125
      %p134 = scmp.eq.s32.totalorder %s18, 1
      %p135 = por %p133, %p134
      %p136 = scmp.ne.s32.totalorder %s125, %s126
      %p137 = scmp.eq.s32.totalorder %s18, 0
      %p138 = por %p136, %p137
      %p139 = scmp.ne.s32.totalorder %s125, %s126
      %p140 = scmp.eq.s32.totalorder %s19, 1
      %p141 = por %p139, %p140
      %p143 = scmp.ne.s32.totalorder %s126, %s142
      %p144 = scmp.eq.s32.totalorder %s19, 0
      %p145 = por %p143, %p144
      %s146 = ssub.s32 %s20, %s39
      %s147 = ssub.s32 %s21, %s35
      %s148 = sor.u32 %s146, %s147
      %s149 = ssub.s32 %s22, %s31
      %s150 = sor.u32 %s148, %s149
      %p151 = scmp.eq.s32.totalorder %s150, 0
      %s153 = sadd.s32 %s152, 1
      %s154 = scalar_select %p151, %s152, %s153
      %p157 = pneg %p151
      %p158 = scmp.eq.s32.totalorder %s13, 1
      %p159 = por %p157, %p158
      %p160 = scmp.ne.s32.totalorder %s152, %s155
      %p161 = scmp.eq.s32.totalorder %s13, 0
      %p162 = por %p160, %p161
      %p163 = scmp.ne.s32.totalorder %s152, %s155
      %p164 = scmp.eq.s32.totalorder %s18, 1
      %p165 = por %p163, %p164
      %p166 = scmp.ne.s32.totalorder %s155, %s156
      %p167 = scmp.eq.s32.totalorder %s18, 0
      %p168 = por %p166, %p167
      %p169 = scmp.ne.s32.totalorder %s155, %s156
      %p170 = scmp.eq.s32.totalorder %s19, 1
      %p171 = por %p169, %p170
      %p173 = scmp.ne.s32.totalorder %s156, %s172
      %p174 = scmp.eq.s32.totalorder %s19, 0
      %p175 = por %p173, %p174
      %p176 = scmp.le.s32.totalorder 1, %s13
      %p177 = scmp.lt.s32.totalorder %s13, 3
      %p178 = pnand %p176, %p177
      %p179 = pneg %p178
      // Predicated region
      $region9: #{tpu_custom_call.1} parent=5 // pred_check
        _
      $region10: #{tpu_custom_call.1} parent=5 // pred_check_branch
        %181 = sbr.rel (%p178) target = $region12
      $region11: #{tpu_custom_call.1} parent=5 // pred_region
        %s182 = ssub.s32 %s13, 1
        // Predicated region
        $region13: #{tpu_custom_call.1} parent=11 // pred_check
          %p183 = pneg %p86
        $region14: #{tpu_custom_call.1} parent=11 // pred_check_branch
          %185 = sbr.rel (%p183) target = $region16
        $region15: #{tpu_custom_call.1} parent=11 // pred_region
          %p186 = scmp.lt.s32.totalorder %s24, 0
          %s187 = scalar_select %p186, %s24, 0
          %s188 = smul.addr %s187, 4
          %s189 = scalar_lea.vmem %s1, %s188
        $region16: #{tpu_custom_call.1} parent=11 // pred_fallthru
          _
        // Predicated region
        $region17: #{tpu_custom_call.1} parent=11 // pred_check
          %p190 = pneg %p112
        $region18: #{tpu_custom_call.1} parent=11 // pred_check_branch
          %192 = sbr.rel (%p190) target = $region20
        $region19: #{tpu_custom_call.1} parent=11 // pred_region
          %p193 = scmp.lt.s32.totalorder %s24, 0
          %s194 = scalar_select %p193, %s24, 0
          %s195 = smul.addr %s194, 8
          %s196 = scalar_lea.vmem %s2, %s195
        $region20: #{tpu_custom_call.1} parent=11 // pred_fallthru
          _
        // Predicated region
        $region21: #{tpu_custom_call.1} parent=11 // pred_check
          %p197 = pneg %p138
        $region22: #{tpu_custom_call.1} parent=11 // pred_check_branch
          %199 = sbr.rel (%p197) target = $region24
        $region23: #{tpu_custom_call.1} parent=11 // pred_region
          %p200 = scmp.lt.s32.totalorder %s24, 0
          %s201 = scalar_select %p200, %s24, 0
          %s202 = smul.addr %s201, 8
          %s203 = scalar_lea.vmem %s3, %s202
        $region24: #{tpu_custom_call.1} parent=11 // pred_fallthru
          _
      $region12: #{tpu_custom_call.1} parent=5 // pred_fallthru
        _
      %p204 = scmp.lt.s32.totalorder %s13, 2
      // Predicated region
      $region25: #{tpu_custom_call.1} parent=5 // pred_check
        %p205 = pneg %p204
      $region26: #{tpu_custom_call.1} parent=5 // pred_check_branch
        %207 = sbr.rel (%p205) target = $region28
      $region27: #{tpu_custom_call.1} parent=5 // pred_region
        // Predicated region
        $region29: #{tpu_custom_call.1} parent=27 // pred_check
          %p208 = pneg %p54
        $region30: #{tpu_custom_call.1} parent=27 // pred_check_branch
          %210 = sbr.rel (%p208) target = $region32
        $region31: #{tpu_custom_call.1} parent=27 // pred_region
          %s211 = smul.u32 2, %s22
          %p212 = scmp.lt.s32.totalorder %s20, 1
          %s213 = scalar_select %p212, %s20, 1
          %p214 = scmp.lt.s32.totalorder %s211, 1
          %s215 = scalar_select %p214, %s211, 1
          %s216 = smul.addr %s213, 2
          %s217 = sadd.s32 %s215, %s216
          %s218 = smul.addr %s217, 4
          %s219 = scalar_lea.vmem %s0, %s218
          %s220 = smul.u32 2, %s22
        $region32: #{tpu_custom_call.1} parent=27 // pred_fallthru
          _
      $region28: #{tpu_custom_call.1} parent=5 // pred_fallthru
        _
      %p221 = scmp.le.s32.totalorder 1, %s13
      %p222 = scmp.lt.s32.totalorder %s13, 3
      %p223 = pnand %p221, %p222
      %p224 = pneg %p223
      // Predicated region
      $region33: #{tpu_custom_call.1} parent=5 // pred_check
        _
      $region34: #{tpu_custom_call.1} parent=5 // pred_check_branch
        %226 = sbr.rel (%p223) target = $region36
      $region35: #{tpu_custom_call.1} parent=5 // pred_region
        %s227 = ssub.s32 %s13, 1
        %s228 = smul.u32 2, %s25
        %p229 = scmp.lt.s32.totalorder %s23, 1
        %s230 = scalar_select %p229, %s23, 1
        %p231 = scmp.lt.s32.totalorder %s228, 1
        %s232 = scalar_select %p231, %s228, 1
        %s233 = smul.addr %s230, 2
        %s234 = sadd.s32 %s232, %s233
        %s235 = smul.addr %s234, 4
        %s236 = scalar_lea.vmem %s0, %s235
        %p237 = pneg %p60
        %p238 = pneg %p57
        %p239 = scmp.lt.s32.totalorder %s24, 0
        %s240 = scalar_select %p239, %s24, 0
        %s241 = smul.addr %s240, 4
        %s242 = scalar_lea.vmem %s1, %s241
        %p243 = pneg %p86
        %p244 = pneg %p83
        %p245 = scmp.lt.s32.totalorder %s24, 0
        %s246 = scalar_select %p245, %s24, 0
        %s247 = smul.addr %s246, 8
        %s248 = scalar_lea.vmem %s2, %s247
        %p249 = pneg %p112
        %p250 = pneg %p109
        %p251 = scmp.lt.s32.totalorder %s24, 0
        %s252 = scalar_select %p251, %s24, 0
        %s253 = smul.addr %s252, 8
        %s254 = scalar_lea.vmem %s3, %s253
        %p255 = pneg %p138
        %p256 = pneg %p135
        %p257 = pneg %p168
        %p258 = pneg %p165
        %s259 = sand.u32 %s155, 1
        %s260 = scalar_lea.sflag [#allocation3], %s259
        %s261 = sand.u32 %s155, 1
        %s262 = smul.addr %s261, 8
        %s263 = scalar_lea.vmem [#allocation2], %s262
        %s264 = smul.u32 2, %s25
        %p265 = scmp.lt.s32.totalorder %s23, 1
        %s266 = scalar_select %p265, %s23, 1
        %p267 = scmp.lt.s32.totalorder %s264, 1
        %s268 = scalar_select %p267, %s264, 1
        %s269 = smul.addr %s266, 2
        %s270 = sadd.s32 %s268, %s269
        %s271 = smul.addr %s270, 4
        %s272 = scalar_lea.vmem %s0, %s271
        %s273 = smul.u32 2, %s25
        %p274 = scmp.lt.s32.totalorder %s24, 0
        %s275 = scalar_select %p274, %s24, 0
        %s276 = smul.addr %s275, 4
        %s277 = scalar_lea.vmem %s1, %s276
        %p278 = scmp.lt.s32.totalorder %s24, 0
        %s279 = scalar_select %p278, %s24, 0
        %s280 = smul.addr %s279, 8
        %s281 = scalar_lea.vmem %s2, %s280
        %p282 = scmp.lt.s32.totalorder %s24, 0
        %s283 = scalar_select %p282, %s24, 0
        %s284 = smul.addr %s283, 8
        %s285 = scalar_lea.vmem %s3, %s284
        %s286 = smul.u32 2, %s25
        %v288 = vld [vmem:[%s277] sm:$0xf]
        %v289 = vld [vmem:[%s281] sm:$0xff]
        %v290 = vld [vmem:[%s285] sm:$0xff]
        %v291 = vld [vmem:[%s272] sm:$0xff]
        %v293 = vcombine.high %v291, %v291
        %v295 = vpack.c.bf16 %v291, %v291
        %v296 = vpack.c.bf16 %v293, %v293
        %vm297 = vcmask 31744
        %v299 = vsel %vm297, %v288, 0
        %vm301 = vcmask 1041408
        %v303 = vsel %vm301, %v295, 0
        %v306 = vsel %vm301, %v296, 0
        %308 = vmatprep.subr.bf16.mxu0 %v306
        %309 = vmatpush1.bf16.msra.mxu0 %v303
        %310 = vmatprep.subr.bf16.mxu0 0
        %311 = vmatpush1.bf16.msra.mxu0 0
        %312 = vmatprep.subr.bf16.mxu0 0
        %313 = vmatpush1.bf16.msra.mxu0 0
        %314 = vmatprep.subr.bf16.mxu0 0
        %315 = vmatpush1.bf16.msra.mxu0 0
        %316 = vmatprep.subr.bf16.mxu0 0
        %317 = vmatpush1.bf16.msra.mxu0 0
        %318 = vmatprep.subr.bf16.mxu0 0
        %319 = vmatpush1.bf16.msra.mxu0 0
        %320 = vmatprep.subr.bf16.mxu0 0
        %321 = vmatpush1.bf16.msra.mxu0 0
        %322 = vmatprep.subr.bf16.mxu0 0
        %323 = vmatpush1.bf16.msra.mxu0 0
        %324 = vmatprep.subr.bf16.mxu0 0
        %325 = vmatpush1.bf16.msra.mxu0 0
        %326 = vmatprep.subr.bf16.mxu0 0
        %327 = vmatpush1.bf16.msra.mxu0 0
        %328 = vmatprep.subr.bf16.mxu0 0
        %329 = vmatpush1.bf16.msra.mxu0 0
        %330 = vmatprep.subr.bf16.mxu0 0
        %331 = vmatpush1.bf16.msra.mxu0 0
        %332 = vmatprep.subr.bf16.mxu0 0
        %333 = vmatpush1.bf16.msra.mxu0 0
        %334 = vmatprep.subr.bf16.mxu0 0
        %335 = vmatpush1.bf16.msra.mxu0 0
        %336 = vmatprep.subr.bf16.mxu0 0
        %337 = vmatpush1.bf16.msra.mxu0 0
        %338 = vmatprep.subr.bf16.mxu0 0
        %339 = vmatpush1.bf16.msra.mxu0 0
        %340 = vmatprep.mubr.bf16.mxu0 0
        %341 = vmatmul.mubr.bf16.gmra.mrb[0].mxu0 %v299
        %v342 = vpop.f32.mrb[0].mxu0
        %v343 = vadd.f32 0.0, %v342
        %v344 = vpop.f32.mrb[0].mxu0
        %v345 = vadd.f32 0.0, %v344
        %v346 = vpop.f32.mrb[0].mxu0
        %v347 = vpop.f32.mrb[0].mxu0
        %348 = vdwg.mxu0
        %350 = vset.pattern.permute.xlu0 0
        %351 = vperm.xlu0 %350, %v289
        %v352 = vpop.permute.xlu0 %351
        %v354 = vmul.f32 %v343, %v352
        %v355 = vmul.f32 %v345, %v352
        %357 = vset.pattern.permute.xlu0 0
        %358 = vperm.xlu0 %357, %v290
        %v359 = vpop.permute.xlu0 %358
        %v361 = vadd.f32 %v354, %v359
        %v362 = vadd.f32 %v355, %v359
        %v363 = vpack.c.bf16 %v361, %v361
        %v364 = vpack.c.bf16 %v362, %v362
        %v367 = vunpack.c.l.b16 %v363
        %v368 = vunpack.c.l.b16 %v364
        %v369 = vpack.c.b16 %v368, %v367
        %371 = vst [vmem:[%s263] sm:$0xff] %v369
        %s372 = sand.u32 %s155, 1
        %s373 = scalar_lea.sflag [#allocation3], %s372
        %s374 = sand.u32 %s155, 1
        %s375 = smul.addr %s374, 8
        %s376 = scalar_lea.vmem [#allocation2], %s375
        // Predicated region
        $region37: #{tpu_custom_call.1} parent=35 // pred_check
          %p377 = pneg %p165
        $region38: #{tpu_custom_call.1} parent=35 // pred_check_branch
          %379 = sbr.rel (%p377) target = $region40
        $region39: #{tpu_custom_call.1} parent=35 // pred_region
          %s380 = smul.u32 2, %s25
          %s382 = ssub.s32 128, 128
          %383 = vsyncadd %s373, %s382
          %s384 = smul.addr %s24, 2
          %s385 = sadd.s32 %s380, %s384
          %s386 = smul.addr %s23, 2
          %s387 = sadd.s32 %s385, %s386
          %s388 = smul.addr %s387, 64
          %s389 = scalar_lea.hbm %s4, %s388
          %s391 = sshll.u32 %s376, 4
          %s392 = int_to_ptr.vmem [resolvable:$true] %s391
          %394 = dma.vmem_to_hbm [thread:$0]  %s392, 128, %s389, %s373
        $region40: #{tpu_custom_call.1} parent=35 // pred_fallthru
          _
      $region36: #{tpu_custom_call.1} parent=5 // pred_fallthru
        _
      %p395 = scmp.le.s32.totalorder 2, %s13
      // Predicated region
      $region41: #{tpu_custom_call.1} parent=5 // pred_check
        %p396 = pneg %p395
      $region42: #{tpu_custom_call.1} parent=5 // pred_check_branch
        %398 = sbr.rel (%p396) target = $region44
      $region43: #{tpu_custom_call.1} parent=5 // pred_region
        %s399 = ssub.s32 %s13, 2
        // Predicated region
        $region45: #{tpu_custom_call.1} parent=43 // pred_check
          %p400 = pneg %p171
        $region46: #{tpu_custom_call.1} parent=43 // pred_check_branch
          %402 = sbr.rel (%p400) target = $region48
        $region47: #{tpu_custom_call.1} parent=43 // pred_region
          %s403 = sand.u32 %s156, 1
          %s404 = scalar_lea.sflag [#allocation3], %s403
          %s405 = sand.u32 %s156, 1
          %s406 = smul.addr %s405, 8
          %s407 = scalar_lea.vmem [#allocation2], %s406
          %408 = dma.done %s404, 128
        $region48: #{tpu_custom_call.1} parent=43 // pred_fallthru
          _
      $region44: #{tpu_custom_call.1} parent=5 // pred_fallthru
        _
    $region6: #{tpu_custom_call.1} parent=1 // loop_footer
      %s17 = sadd.s32 1, %s13
    $region7: #{tpu_custom_call.1} parent=1 // loop_footer_branch
      %12 = sbr.rel target = $region3
    $region8: #{tpu_custom_call.1} parent=1 // loop_exit
      _
    %409 = vsyncpa [#allocation3], 1
    %s410 = scalar_lea.sflag [#allocation3], 1
    %411 = vsyncpa %s410, 1

</llo_original>
